<compile_context>
chip_gen: v6e
topology: v6e:2x2x1
jax: 0.10.0
libtpu: 0.0.40
codegen_flags: <defaults>
</compile_context>

<pallas_src>
import functools
import math

import jax
import jax.numpy as jnp
from jax.experimental import pallas as pl
from jax.experimental.pallas import tpu as pltpu


def _ls_cross_kernel(target_ref, output_ref, out_ref, acc_ref, *,
                     neg_conf, neg_smooth, pad_col, pad_row, tv):
    """Accumulates the cross term  -sum_j p_ij * output_ij  per batch tile."""
    j = pl.program_id(1)
    nv = pl.num_programs(1)

    out = output_ref[...].astype(jnp.float32)          # (tb, tv) log-probs
    tgt = target_ref[...]                               # (tb, 1)  int32
    tb = out.shape[0]

    # Row mask folded into the coefficients (masked rows contribute 0).
    row_keep = tgt != pad_row                            # (tb, 1) bool
    neg_s_row = jnp.where(row_keep, neg_smooth, 0.0).astype(jnp.float32)   # (tb, 1)
    neg_c_row = jnp.where(row_keep, neg_conf, 0.0).astype(jnp.float32)     # (tb, 1)

    # Compare a local iota against tile-local target / pad column (no full-tile add).
    lane = jax.lax.broadcasted_iota(jnp.int32, (tb, tv), 1)
    tgt_local = tgt - j * tv                             # (tb, 1)
    pad_local = pad_col - j * tv                         # scalar

    coeff = jnp.where(lane == pad_local, 0.0, neg_s_row)         # pad column -> 0
    coeff = jnp.where(lane == tgt_local, neg_c_row, coeff)       # target column -> -confidence
    contrib = out * coeff                                         # (tb, tv) = -p * output

    # Fold 128-lane groups with tile-aligned slices: pure VPU adds, no relayout, no XLU.
    part = contrib[:, 0:128]
    for g in range(1, tv // 128):
        part = part + contrib[:, g * 128:(g + 1) * 128]           # (tb, 128)

    @pl.when(j == 0)
    def _():
        acc_ref[...] = part

    @pl.when(j > 0)
    def _():
        acc_ref[...] += part

    # One small sublane reduce + lane-dense store per batch tile (not per grid step).
    @pl.when(j == nv - 1)
    def _():
        out_ref[...] = jnp.sum(acc_ref[...], axis=0, keepdims=True)   # (1, 128)


def _pick_tiles(B, C, itemsize=4, max_block_bytes=2 * 1024 * 1024):
    """Largest tile-aligned (tb, tv) with tb|B, tv|C, tb%8==0, tv%128==0, block <= cap.

    The ~2 MiB cap keeps the double-buffered working set well under the scoped-VMEM
    defaults on every generation (v5e 16 MiB, v6e 32 MiB, v7x 32 of 64 MiB)."""
    max_tv = max(128, min(C, max_block_bytes // (8 * itemsize)))
    tv = 128
    d = 128
    while d <= min(C, max_tv):
        if C % d == 0:
            tv = d
        d += 128
    max_tb = max(8, max_block_bytes // (tv * itemsize))
    tb = 8
    d = 8
    while d <= min(B, max_tb):
        if B % d == 0:
            tb = d
        d += 8
    return tb, tv


def label_smoothing_loss(output, target, *, vocab_size, label_smoothing,
                         ignore_index=-100):
    """output: (B, C) float log-probs with C >= vocab_size; target: (B,) int. Returns scalar."""
    assert 0.0 < label_smoothing <= 1.0
    B, C = output.shape
    # TODO(synk): pad/mask ragged shapes; demo wrapper assumes tile-aligned (B%8==0, C%128==0).
    assert B % 8 == 0 and C % 128 == 0, "wrapper assumes tile-aligned shapes"

    s = float(label_smoothing) / (vocab_size - 2)
    c = 1.0 - float(label_smoothing)
    # torch: one_hot[ignore_index] uses (possibly negative) python indexing into a vocab_size
    # buffer, while the row mask compares raw target values against ignore_index.
    pad_col = ignore_index if ignore_index >= 0 else ignore_index + vocab_size
    pad_row = ignore_index

    tb, tv = _pick_tiles(B, C)
    nb, nv = B // tb, C // tv

    target_i32 = target.astype(jnp.int32)
    target2d = target_i32.reshape(B, 1)

    kernel = functools.partial(
        _ls_cross_kernel,
        neg_conf=-c, neg_smooth=-s,
        pad_col=int(pad_col), pad_row=int(pad_row), tv=tv)

    partials = pl.pallas_call(
        kernel,
        out_shape=jax.ShapeDtypeStruct((nb, 128), jnp.float32),
        grid_spec=pltpu.PrefetchScalarGridSpec(
            num_scalar_prefetch=0,
            grid=(nb, nv),                                   # reduction (class) axis last
            in_specs=[
                pl.BlockSpec((tb, 1), lambda i, j: (i, 0)),   # target column vector
                pl.BlockSpec((tb, tv), lambda i, j: (i, j)),  # log-prob tile
            ],
            out_specs=pl.BlockSpec((1, 128), lambda i, j: (i, 0)),  # lane-dense partials
            scratch_shapes=[pltpu.VMEM((tb, 128), jnp.float32)],
        ),
        compiler_params=pltpu.CompilerParams(
            dimension_semantics=("parallel", "arbitrary"),    # batch axis can split across TCs
            vmem_limit_bytes=32 * 1024 * 1024,
        ),
    )(target2d, output)

    cross = jnp.sum(partials)                                 # -sum p*output

    # Entropy term sum(p*log p): per-row constant, independent of `output` -> plain JAX.
    # NOTE: as in the reference, when C > vocab_size the extension columns carry
    # smoothing_value too (torch fills the "ext_zeros" buffer with smoothing_value).
    s_logs = s * math.log(s)
    c_logc = c * math.log(c) if c > 0.0 else 0.0
    valid = target_i32 != pad_row
    tgt_is_padcol = target_i32 == pad_col                     # scatter overrides the zeroed column
    n_smooth = jnp.where(tgt_is_padcol, C - 1, C - 2).astype(jnp.float32)
    entropy = jnp.sum(jnp.where(valid, n_smooth * s_logs + c_logc, 0.0))

    return entropy + cross


def _reference_loss(output, target, *, vocab_size, label_smoothing, ignore_index):
    """Pure-JAX port of the PyTorch forward, for verification."""
    B, C = output.shape
    smoothing_value = label_smoothing / (vocab_size - 2)
    confidence = 1.0 - label_smoothing
    pad_col = ignore_index if ignore_index >= 0 else ignore_index + vocab_size
    p = jnp.full((B, C), smoothing_value, dtype=jnp.float32)
    p = p.at[:, pad_col].set(0.0)
    p = p.at[jnp.arange(B), target].set(confidence)
    p = jnp.where((target == ignore_index)[:, None], 0.0, p)
    safe_p = jnp.where(p > 0.0, p, 1.0)
    return jnp.sum(jnp.where(p > 0.0, p * (jnp.log(safe_p) - output), 0.0))


if __name__ == "__main__":
    key = jax.random.PRNGKey(0)
    k_logits, k_tgt, k_pad = jax.random.split(key, 3)

    B = 16            # batch
    V = 256           # vocab_size == n_classes (real_size extension path is 0 here)
    LABEL_SMOOTHING = 0.1
    IGNORE_INDEX = 0  # padding token index

    logits = jax.random.normal(k_logits, (B, V), dtype=jnp.float32)
    output = jax.nn.log_softmax(logits, axis=-1)          # F.kl_div expects log-probs
    target = jax.random.randint(k_tgt, (B,), 0, V, dtype=jnp.int32)
    # Force a few padding rows to exercise the masked_fill_ path.
    pad_mask = jax.random.bernoulli(k_pad, 0.25, (B,))
    target = jnp.where(pad_mask, IGNORE_INDEX, target)

    loss = label_smoothing_loss(
        output, target,
        vocab_size=V, label_smoothing=LABEL_SMOOTHING, ignore_index=IGNORE_INDEX)
    loss = jax.block_until_ready(loss)

    ref = _reference_loss(
        output, target,
        vocab_size=V, label_smoothing=LABEL_SMOOTHING, ignore_index=IGNORE_INDEX)

    assert jnp.allclose(loss, ref, rtol=1e-5, atol=1e-4), (loss, ref)
    print("KERNEL_OK")
</pallas_src>

<mosaic_0001>
module attributes {stable_mosaic.version = 11 : i64} {
  func.func @_ls_cross_kernel(%arg0: i32, %arg1: i32, %arg2: memref<16x1xi32, #tpu.memory_space<vmem>>, %arg3: memref<16x256xf32, #tpu.memory_space<vmem>>, %arg4: memref<1x128xf32, #tpu.memory_space<vmem>>, %arg5: memref<16x128xf32, #tpu.memory_space<vmem>>) attributes {dimension_semantics = [#tpu.dimension_semantics<parallel>, #tpu.dimension_semantics<arbitrary>], iteration_bounds = array<i64: 1, 1>, scalar_prefetch = 0 : i64, scratch_operands = 1 : i64, tpu.core_type = #tpu.core_type<tc>, window_params = [{transform_indices = @transform_0, window_bounds = array<i64: 16, 1>}, {transform_indices = @transform_1, window_bounds = array<i64: 16, 256>}, {transform_indices = @transform_2, window_bounds = array<i64: 1, 128>}]} {
    %c0 = arith.constant 0 : index
    %c0_0 = arith.constant 0 : index
    %0 = vector.load %arg3[%c0, %c0_0] : memref<16x256xf32, #tpu.memory_space<vmem>>, vector<16x256xf32>
    %c0_1 = arith.constant 0 : index
    %c0_2 = arith.constant 0 : index
    %1 = vector.load %arg2[%c0_1, %c0_2] : memref<16x1xi32, #tpu.memory_space<vmem>>, vector<16x1xi32>
    %c0_i32 = arith.constant 0 : i32
    %2 = vector.broadcast %c0_i32 : i32 to vector<16x1xi32>
    %3 = arith.cmpi ne, %1, %2 : vector<16x1xi32>
    %cst = arith.constant -3.93700786E-4 : f32
    %cst_3 = arith.constant 0.000000e+00 : f32
    %4 = vector.broadcast %cst : f32 to vector<16x1xf32>
    %5 = vector.broadcast %cst_3 : f32 to vector<16x1xf32>
    %6 = arith.select %3, %4, %5 : vector<16x1xi1>, vector<16x1xf32>
    %cst_4 = arith.constant -0.899999976 : f32
    %cst_5 = arith.constant 0.000000e+00 : f32
    %7 = vector.broadcast %cst_4 : f32 to vector<16x1xf32>
    %8 = vector.broadcast %cst_5 : f32 to vector<16x1xf32>
    %9 = arith.select %3, %7, %8 : vector<16x1xi1>, vector<16x1xf32>
    %10 = tpu.iota {dimensions = array<i32: 1>} : vector<16x256xi32>
    %c256_i32 = arith.constant 256 : i32
    %11 = arith.muli %arg1, %c256_i32 : i32
    %12 = vector.broadcast %11 : i32 to vector<16x1xi32>
    %13 = arith.subi %1, %12 : vector<16x1xi32>
    %c256_i32_6 = arith.constant 256 : i32
    %14 = arith.muli %arg1, %c256_i32_6 : i32
    %c0_i32_7 = arith.constant 0 : i32
    %15 = arith.subi %c0_i32_7, %14 : i32
    %16 = vector.broadcast %15 : i32 to vector<16x256xi32>
    %17 = arith.cmpi eq, %10, %16 : vector<16x256xi32>
    %cst_8 = arith.constant 0.000000e+00 : f32
    %18 = vector.broadcast %cst_8 : f32 to vector<16x256xf32>
    %19 = vector.shape_cast %6 : vector<16x1xf32> to vector<16x1xf32>
    %20 = vector.broadcast %19 : vector<16x1xf32> to vector<16x256xf32>
    %21 = arith.select %17, %18, %20 : vector<16x256xi1>, vector<16x256xf32>
    %22 = vector.broadcast %13 : vector<16x1xi32> to vector<16x256xi32>
    %23 = arith.cmpi eq, %10, %22 : vector<16x256xi32>
    %24 = vector.shape_cast %9 : vector<16x1xf32> to vector<16x1xf32>
    %25 = vector.broadcast %24 : vector<16x1xf32> to vector<16x256xf32>
    %26 = arith.select %23, %25, %21 : vector<16x256xi1>, vector<16x256xf32>
    %27 = arith.mulf %0, %26 : vector<16x256xf32>
    %28 = vector.extract_strided_slice %27 {offsets = [0, 0], sizes = [16, 128], strides = [1, 1]} : vector<16x256xf32> to vector<16x128xf32>
    %29 = vector.extract_strided_slice %27 {offsets = [0, 128], sizes = [16, 128], strides = [1, 1]} : vector<16x256xf32> to vector<16x128xf32>
    %30 = arith.addf %28, %29 : vector<16x128xf32>
    %c0_i32_9 = arith.constant 0 : i32
    %31 = arith.cmpi eq, %arg1, %c0_i32_9 : i32
    %32 = arith.extui %31 : i1 to i32
    %c0_i32_10 = arith.constant 0 : i32
    %33 = arith.cmpi ne, %32, %c0_i32_10 : i32
    scf.if %33 {
      %c0_15 = arith.constant 0 : index
      %c0_16 = arith.constant 0 : index
      %40 = vector.load %arg5[%c0_15, %c0_16] : memref<16x128xf32, #tpu.memory_space<vmem>>, vector<16x128xf32>
      tpu.vector_store %arg5[%c0_15, %c0_16], %30 {strides = array<i32>} : memref<16x128xf32, #tpu.memory_space<vmem>>, vector<16x128xf32>,
    } else {
    }
    %c0_i32_11 = arith.constant 0 : i32
    %34 = arith.cmpi sgt, %arg1, %c0_i32_11 : i32
    %35 = arith.extui %34 : i1 to i32
    %c0_i32_12 = arith.constant 0 : i32
    %36 = arith.cmpi ne, %35, %c0_i32_12 : i32
    scf.if %36 {
      %c0_15 = arith.constant 0 : index
      %c0_16 = arith.constant 0 : index
      %40 = vector.load %arg5[%c0_15, %c0_16] : memref<16x128xf32, #tpu.memory_space<vmem>>, vector<16x128xf32>
      %41 = arith.addf %40, %30 : vector<16x128xf32>
      %c0_17 = arith.constant 0 : index
      %c0_18 = arith.constant 0 : index
      %42 = vector.load %arg5[%c0_17, %c0_18] : memref<16x128xf32, #tpu.memory_space<vmem>>, vector<16x128xf32>
      tpu.vector_store %arg5[%c0_17, %c0_18], %41 {strides = array<i32>} : memref<16x128xf32, #tpu.memory_space<vmem>>, vector<16x128xf32>,
    } else {
    }
    %c0_i32_13 = arith.constant 0 : i32
    %37 = arith.cmpi eq, %arg1, %c0_i32_13 : i32
    %38 = arith.extui %37 : i1 to i32
    %c0_i32_14 = arith.constant 0 : i32
    %39 = arith.cmpi ne, %38, %c0_i32_14 : i32
    scf.if %39 {
      %c0_15 = arith.constant 0 : index
      %c0_16 = arith.constant 0 : index
      %40 = vector.load %arg5[%c0_15, %c0_16] : memref<16x128xf32, #tpu.memory_space<vmem>>, vector<16x128xf32>
      %cst_17 = arith.constant dense<0.000000e+00> : vector<128xf32>
      %41 = vector.multi_reduction <add>, %40, %cst_17 [0] : vector<16x128xf32> to vector<128xf32>
      %42 = vector.shape_cast %41 : vector<128xf32> to vector<1x128xf32>
      %c0_18 = arith.constant 0 : index
      %c0_19 = arith.constant 0 : index
      %43 = vector.load %arg4[%c0_18, %c0_19] : memref<1x128xf32, #tpu.memory_space<vmem>>, vector<1x128xf32>
      tpu.vector_store %arg4[%c0_18, %c0_19], %42 {strides = array<i32>} : memref<1x128xf32, #tpu.memory_space<vmem>>, vector<1x128xf32>,
    } else {
    }
    return
  }
  func.func @transform_0(%arg0: i32, %arg1: i32) -> (i32, i32) {
    %c0_i32 = arith.constant 0 : i32
    %c0_i32_0 = arith.constant 0 : i32
    return %arg0, %c0_i32 : i32, i32
  }
  func.func @transform_1(%arg0: i32, %arg1: i32) -> (i32, i32) {
    %c0_i32 = arith.constant 0 : i32
    return %arg0, %arg1 : i32, i32
  }
  func.func @transform_2(%arg0: i32, %arg1: i32) -> (i32, i32) {
    %c0_i32 = arith.constant 0 : i32
    %c0_i32_0 = arith.constant 0 : i32
    return %arg0, %c0_i32 : i32, i32
  }
}

</mosaic_0001>

<llo_original>
// kernel: tpu_custom_call.1
$region0: #{tpu_custom_call.1}
  #allocation0 [shape = 'u32[]', space=smem, size = 0x4, offset = 0x4, fixed_abs, tag = 'smem constant byte address 0x4 - core index']
  #allocation1 [shape = 'u32[144,128]{1,0:T(1,128)}', space=vmem, size = 0x12000, scoped, tag = 'internal scratch']
  #allocation2 [shape = 'f32[16,128]{1,0:T(8,128)}', space=vmem, size = 0x2000, scoped, tag = 'scratch operand']
  %s0 = inlined_call_operand.vmem [shape: s32[16,1], index: 0, kind: input, shape index: {}]
  %s1 = inlined_call_operand.hbm [shape: f32[16,256], index: 1, kind: input, shape index: {}]
  %s2 = inlined_call_operand.hbm [shape: f32[1,128], index: 2, kind: output, shape index: {}]
  %s3 = sld [smem:[#allocation0]]
  $region34: #{tpu_custom_call.1} parent=0
    _
  %s5 = ssub.s32 1, %s3
  %s6 = scalar_select 0, %s5, %s3
  $region1: #{tpu_custom_call.1} parent=0
    #allocation3 [shape = 'u8[16384]{0}', space=vmem, size = 0x4000, scoped, tag = 'input window, operand 1, single buffered']
    #allocation4 [shape = 's32[1]{0}', space=sflag, size = 0x4, scoped, tag = 'scoped memory for tpu_custom_call.1']
    #allocation5 [shape = 's32[1]{0}', space=sflag, size = 0x4, scoped, tag = 'scoped memory for tpu_custom_call.1']
    #allocation6 [shape = 'u8[512]{0}', space=vmem, size = 0x400, scoped, tag = 'output window, operand 0, single buffered']
    %7 = vsyncpa [#allocation4], 0
    %8 = vsyncpa [#allocation5], 0
    // Predicated region
    $region2: #{tpu_custom_call.1} parent=1 // pred_check
      _
    $region3: #{tpu_custom_call.1} parent=1 // pred_check_branch
      %10 = sbr.rel (0) target = $region5
    $region4: #{tpu_custom_call.1} parent=1 // pred_region
      _
    $region5: #{tpu_custom_call.1} parent=1 // pred_fallthru
      _
    // Predicated region
    $region6: #{tpu_custom_call.1} parent=1 // pred_check
      _
    $region7: #{tpu_custom_call.1} parent=1 // pred_check_branch
      %12 = sbr.rel (0) target = $region9
    $region8: #{tpu_custom_call.1} parent=1 // pred_region
      %s14 = ssub.s32 512, 512
      %15 = vsyncadd [#allocation4], %s14
      %s16 = sshll.u32 [#allocation3], 4
      %s17 = int_to_ptr.vmem [resolvable:$true] %s16
      %22 = dma.hbm_to_vmem [thread:$0]  %s1, 512, %s17, [#allocation4], 256, 256, 16
    $region9: #{tpu_custom_call.1} parent=1 // pred_fallthru
      _
    // Predicated region
    $region10: #{tpu_custom_call.1} parent=1 // pred_check
      _
    $region11: #{tpu_custom_call.1} parent=1 // pred_check_branch
      %24 = sbr.rel (0) target = $region13
    $region12: #{tpu_custom_call.1} parent=1 // pred_region
      %25 = dma.done [#allocation4], 512
    $region13: #{tpu_custom_call.1} parent=1 // pred_fallthru
      _
    %v26 = vld [vmem:[#allocation3] sm:$0xff]
    %v27 = vld [vmem:[#allocation3 + $0x8] sm:$0xff]
    %v28 = vld [vmem:[#allocation3 + $0x10] sm:$0xff]
    %v29 = vld [vmem:[#allocation3 + $0x18] sm:$0xff]
    %v30 = vld [vmem:[%s0] sm:$0xff]
    %v31 = vld [vmem:[%s0 + $0x8] sm:$0xff]
    %vm32 = vcmp.ne.s32.totalorder %v30, 0
    %vm33 = vcmp.ne.s32.totalorder %v31, 0
    %v34 = vsel %vm32, -0.0003937008, 0.0
    %v35 = vsel %vm33, -0.0003937008, 0.0
    %v36 = vsel %vm32, -0.9, 0.0
    %v37 = vsel %vm33, -0.9, 0.0
    %v38 = vlaneseq
    %v39 = vand.u32 %v38, 127
    %v40 = vadd.s32 %v39, 128
    %s41 = smul.u32 0, 256
    %v42 = vstv %s41
    %v43 = vsub.s32 %v30, %v42
    %v44 = vsub.s32 %v31, %v42
    %s45 = ssub.s32 0, %s41
    %v46 = vstv %s45
    %vm47 = vcmp.eq.s32.totalorder %v39, %v46
    %vm48 = vcmp.eq.s32.totalorder %v40, %v46
    %50 = vset.pattern.permute.xlu0 0
    %51 = vperm.xlu0 %50, %v34
    %v52 = vpop.permute.xlu0 %51
    %55 = vset.pattern.permute.xlu0 0
    %56 = vperm.xlu0 %55, %v35
    %v57 = vpop.permute.xlu0 %56
    %v59 = vsel %vm47, 0.0, %v52
    %v60 = vsel %vm48, 0.0, %v52
    %v61 = vsel %vm47, 0.0, %v57
    %v62 = vsel %vm48, 0.0, %v57
    %63 = vset.pattern.permute.xlu0 0
    %64 = vperm.xlu0 %63, %v43
    %v65 = vpop.permute.xlu0 %64
    %66 = vset.pattern.permute.xlu0 0
    %67 = vperm.xlu0 %66, %v44
    %v68 = vpop.permute.xlu0 %67
    %vm69 = vcmp.eq.s32.totalorder %v39, %v65
    %vm70 = vcmp.eq.s32.totalorder %v40, %v65
    %vm71 = vcmp.eq.s32.totalorder %v39, %v68
    %vm72 = vcmp.eq.s32.totalorder %v40, %v68
    %74 = vset.pattern.permute.xlu0 0
    %75 = vperm.xlu0 %74, %v36
    %v76 = vpop.permute.xlu0 %75
    %79 = vset.pattern.permute.xlu0 0
    %80 = vperm.xlu0 %79, %v37
    %v81 = vpop.permute.xlu0 %80
    %v83 = vsel %vm69, %v76, %v59
    %v84 = vsel %vm70, %v76, %v60
    %v85 = vsel %vm71, %v81, %v61
    %v86 = vsel %vm72, %v81, %v62
    %v87 = vmul.f32 %v26, %v83
    %v88 = vmul.f32 %v27, %v84
    %v89 = vmul.f32 %v28, %v85
    %v90 = vmul.f32 %v29, %v86
    %v91 = vadd.f32 %v87, %v88
    %v92 = vadd.f32 %v89, %v90
    %p93 = scmp.eq.s32.totalorder 0, 0
    // Predicated region
    $region14: #{tpu_custom_call.1} parent=1 // pred_check
      %p94 = pneg %p93
    $region15: #{tpu_custom_call.1} parent=1 // pred_check_branch
      %96 = sbr.rel (%p94) target = $region17
    $region16: #{tpu_custom_call.1} parent=1 // pred_region
      %97 = vst [vmem:[#allocation2] sm:$0xff] %v91
      %98 = vst [vmem:[#allocation2 + $0x8] sm:$0xff] %v92
    $region17: #{tpu_custom_call.1} parent=1 // pred_fallthru
      _
    %p99 = scmp.gt.s32.totalorder 0, 0
    // Predicated region
    $region18: #{tpu_custom_call.1} parent=1 // pred_check
      %p100 = pneg %p99
    $region19: #{tpu_custom_call.1} parent=1 // pred_check_branch
      %102 = sbr.rel (%p100) target = $region21
    $region20: #{tpu_custom_call.1} parent=1 // pred_region
      %v103 = vld [vmem:[#allocation2] sm:$0xff]
      %v104 = vld [vmem:[#allocation2 + $0x8] sm:$0xff]
      %v105 = vadd.f32 %v103, %v91
      %v106 = vadd.f32 %v104, %v92
      %107 = vst [vmem:[#allocation2] sm:$0xff] %v105
      %108 = vst [vmem:[#allocation2 + $0x8] sm:$0xff] %v106
    $region21: #{tpu_custom_call.1} parent=1 // pred_fallthru
      _
    // Predicated region
    $region22: #{tpu_custom_call.1} parent=1 // pred_check
      %p109 = pneg %p93
    $region23: #{tpu_custom_call.1} parent=1 // pred_check_branch
      %111 = sbr.rel (%p109) target = $region25
    $region24: #{tpu_custom_call.1} parent=1 // pred_region
      %v112 = vld [vmem:[#allocation2] sm:$0xff]
      %v113 = vld [vmem:[#allocation2 + $0x8] sm:$0xff]
      %v114 = vadd.f32 %v112, %v113
      %v115 = vrot.slane %v114, 4
      %v116 = vadd.f32 %v114, %v115
      %v117 = vrot.slane %v116, 2
      %v118 = vadd.f32 %v116, %v117
      %v119 = vrot.slane %v118, 1
      %v120 = vadd.f32 %v118, %v119
      %121 = vst [vmem:[#allocation6] sm:$0x1] %v120
    $region25: #{tpu_custom_call.1} parent=1 // pred_fallthru
      _
    // Predicated region
    $region26: #{tpu_custom_call.1} parent=1 // pred_check
      _
    $region27: #{tpu_custom_call.1} parent=1 // pred_check_branch
      %123 = sbr.rel (0) target = $region29
    $region28: #{tpu_custom_call.1} parent=1 // pred_region
      %s125 = ssub.s32 16, 16
      %126 = vsyncadd [#allocation5], %s125
      %s128 = sshll.u32 [#allocation6], 4
      %s129 = int_to_ptr.vmem [resolvable:$true] %s128
      %131 = dma.vmem_to_hbm [thread:$0]  %s129, 16, %s2, [#allocation5]
    $region29: #{tpu_custom_call.1} parent=1 // pred_fallthru
      _
    // Predicated region
    $region30: #{tpu_custom_call.1} parent=1 // pred_check
      _
    $region31: #{tpu_custom_call.1} parent=1 // pred_check_branch
      %133 = sbr.rel (0) target = $region33
    $region32: #{tpu_custom_call.1} parent=1 // pred_region
      %134 = dma.done [#allocation5], 16
    $region33: #{tpu_custom_call.1} parent=1 // pred_fallthru
      _
    %135 = vsyncpa [#allocation4], 1
    %136 = vsyncpa [#allocation5], 1

</llo_original>
